<compile_context>
chip_gen: v7x
topology: tpu7x:2x2x1
jax: 0.10.0
libtpu: 0.0.40
codegen_flags: <defaults>
</compile_context>

<pallas_src>
import math

import jax
import jax.numpy as jnp
from jax.experimental import pallas as pl
from jax.experimental.pallas import tpu as pltpu


def _pe_add_kernel(x_ref, pe_ref, o_ref):
    # x_ref / o_ref: (rows_tile, cols) with the batch dim squeezed away.
    # pe_ref:        (rows_tile, cols).  Plain elementwise add.
    o_ref[...] = (x_ref[...] + pe_ref[...]).astype(o_ref.dtype)


def make_positional_encoding(d_model: int, max_len: int = 5000,
                             dtype=jnp.float32) -> jnp.ndarray:
    """Deterministic buffer identical to the PyTorch __init__ construction.

    Built once; no per-forward-call cast/slice passes are needed afterwards.
    Note: like the PyTorch module, this assumes an even d_model.
    """
    position = jnp.arange(max_len, dtype=jnp.float32)[:, None]            # (max_len, 1)
    div_term = jnp.exp(
        jnp.arange(0, d_model, 2, dtype=jnp.float32)
        * (-math.log(10000.0) / d_model)
    )                                                                      # (d_model/2,)
    pe = jnp.zeros((max_len, d_model), dtype=jnp.float32)
    pe = pe.at[:, 0::2].set(jnp.sin(position * div_term))
    pe = pe.at[:, 1::2].set(jnp.cos(position * div_term))
    return pe.astype(dtype)


def _row_tile(rows: int, cols: int, itemsize: int,
              target_bytes: int = 4 * 1024 * 1024) -> int:
    """Fixed-size row tile: multiple of 8 rows, ~target_bytes of real VMEM
    (accounting for lane padding to 128), or the full row extent if smaller."""
    padded_cols = ((cols + 127) // 128) * 128
    t = target_bytes // max(padded_cols * itemsize, 1)
    t = (t // 8) * 8
    t = max(t, 8)
    if t >= rows:
        return rows          # full extent is always a legal block dim
    return t                 # multiple of 8


def positional_encoding_forward(x: jnp.ndarray, pe: jnp.ndarray) -> jnp.ndarray:
    """x: (B, S, D); pe: (max_len, D). Returns x + pe[:S] (dropout = identity)."""
    B, S, D = x.shape
    max_len = pe.shape[0]
    out_dtype = jnp.result_type(x.dtype, pe.dtype)
    itemsize = jnp.dtype(out_dtype).itemsize

    flat = S * D
    if D % 128 == 0 or flat % 128 != 0:
        # Direct (B, S, D) layout.  D % 128 == 0 -> lane-dense.  Otherwise this
        # is the rare fallback (S*D not a multiple of 128): masked lane stores,
        # still correct.
        rows, cols = S, D
        x3 = x
        pe_base = pe                                   # full (max_len, D) buffer
        rows_needed = S
    else:
        # Flattened lane-dense layout: (B, S*D//L, L) with L a multiple of 128.
        L = 128
        for cand in (2048, 1024, 512, 256, 128):
            if flat % cand == 0:
                L = cand
                break
        rows, cols = flat // L, L
        x3 = x.reshape(B, rows, cols)
        total = max_len * D
        if total % L == 0:
            # Free reshape of the full buffer; pe[:S].ravel() == pe.ravel()[:S*D]
            # so row-block indices line up with x's.
            pe_base = pe.reshape(total // L, L)
        else:
            pe_base = pe.reshape(-1)[: rows * cols].reshape(rows, cols)
        rows_needed = rows

    t_r = _row_tile(rows, cols, itemsize)
    if t_r % 8 == 0:
        pe_in = pe_base                                # full buffer, no wrapper copy
    else:
        # Full-extent row tile that isn't a multiple of 8: pe's block must equal
        # its own full extent too -> take the (small) slice.
        pe_in = pe_base[:rows_needed]

    grid = (pl.cdiv(rows, t_r), B)                     # batch innermost -> pe resident

    out3 = pl.pallas_call(
        _pe_add_kernel,
        out_shape=jax.ShapeDtypeStruct((B, rows, cols), out_dtype),
        grid_spec=pl.GridSpec(
            grid=grid,
            in_specs=[
                pl.BlockSpec((None, t_r, cols), lambda r, b: (b, r, 0)),   # x
                pl.BlockSpec((t_r, cols), lambda r, b: (r, 0)),            # pe (const over b)
            ],
            out_specs=pl.BlockSpec((None, t_r, cols), lambda r, b: (b, r, 0)),
        ),
        compiler_params=pltpu.CompilerParams(
            dimension_semantics=("parallel", "parallel"),
            vmem_limit_bytes=48 * 1024 * 1024,
        ),
    )(x3, pe_in)

    return out3.reshape(B, S, D)


if __name__ == "__main__":
    max_len = 5000

    # --- Case 1: module-sized test (D=32 -> flattened lane-dense path) -------
    B, S, D = 2, 8, 32
    x = jax.random.normal(jax.random.PRNGKey(0), (B, S, D), dtype=jnp.float32)
    pe = make_positional_encoding(D, max_len=max_len)
    out = jax.block_until_ready(positional_encoding_forward(x, pe))
    ref = x + pe[:S][None, :, :]
    assert out.shape == (B, S, D)
    assert jnp.allclose(out, ref, atol=1e-6), "mismatch (flattened path)"

    # --- Case 2: lane-dense D path (D multiple of 128) ------------------------
    B2, S2, D2 = 2, 16, 128
    x2 = jax.random.normal(jax.random.PRNGKey(1), (B2, S2, D2), dtype=jnp.float32)
    pe2 = make_positional_encoding(D2, max_len=max_len)
    out2 = jax.block_until_ready(positional_encoding_forward(x2, pe2))
    ref2 = x2 + pe2[:S2][None, :, :]
    assert out2.shape == (B2, S2, D2)
    assert jnp.allclose(out2, ref2, atol=1e-6), "mismatch (D-dense path)"

    # --- Case 3: fallback path (S*D not a multiple of 128) --------------------
    B3, S3, D3 = 2, 5, 20
    x3 = jax.random.normal(jax.random.PRNGKey(2), (B3, S3, D3), dtype=jnp.float32)
    pe3 = make_positional_encoding(D3, max_len=max_len)
    out3 = jax.block_until_ready(positional_encoding_forward(x3, pe3))
    ref3 = x3 + pe3[:S3][None, :, :]
    assert out3.shape == (B3, S3, D3)
    assert jnp.allclose(out3, ref3, atol=1e-6), "mismatch (fallback path)"

    print("KERNEL_OK")
</pallas_src>

<mosaic_0001>
module attributes {stable_mosaic.version = 11 : i64} {
  func.func @_pe_add_kernel(%arg0: i32, %arg1: i32, %arg2: memref<1x1x256xf32, #tpu.memory_space<vmem>>, %arg3: memref<1x256xf32, #tpu.memory_space<vmem>>, %arg4: memref<1x1x256xf32, #tpu.memory_space<vmem>>) attributes {dimension_semantics = [#tpu.dimension_semantics<parallel>, #tpu.dimension_semantics<parallel>], iteration_bounds = array<i64: 1, 2>, scalar_prefetch = 0 : i64, scratch_operands = 0 : i64, tpu.core_type = #tpu.core_type<tc>, window_params = [{transform_indices = @transform_0, window_bounds = array<i64: 1, 1, 256>}, {transform_indices = @transform_1, window_bounds = array<i64: 1, 256>}, {transform_indices = @transform_2, window_bounds = array<i64: 1, 1, 256>}]} {
    %c0 = arith.constant 0 : index
    %c0_0 = arith.constant 0 : index
    %c0_1 = arith.constant 0 : index
    %0 = vector.load %arg2[%c0, %c0_0, %c0_1] : memref<1x1x256xf32, #tpu.memory_space<vmem>>, vector<1x1x256xf32>
    %1 = vector.shape_cast %0 : vector<1x1x256xf32> to vector<1x256xf32>
    %c0_2 = arith.constant 0 : index
    %c0_3 = arith.constant 0 : index
    %2 = vector.load %arg3[%c0_2, %c0_3] : memref<1x256xf32, #tpu.memory_space<vmem>>, vector<1x256xf32>
    %3 = arith.addf %1, %2 : vector<1x256xf32>
    %c0_4 = arith.constant 0 : index
    %c0_5 = arith.constant 0 : index
    %c0_6 = arith.constant 0 : index
    %4 = vector.load %arg4[%c0_4, %c0_5, %c0_6] : memref<1x1x256xf32, #tpu.memory_space<vmem>>, vector<1x1x256xf32>
    %5 = vector.shape_cast %4 : vector<1x1x256xf32> to vector<1x256xf32>
    %6 = vector.shape_cast %3 : vector<1x256xf32> to vector<1x1x256xf32>
    tpu.vector_store %arg4[%c0_4, %c0_5, %c0_6], %6 {strides = array<i32>} : memref<1x1x256xf32, #tpu.memory_space<vmem>>, vector<1x1x256xf32>,
    return
  }
  func.func @transform_0(%arg0: i32, %arg1: i32) -> (i32, i32, i32) {
    %c0_i32 = arith.constant 0 : i32
    %c0_i32_0 = arith.constant 0 : i32
    return %arg1, %arg0, %c0_i32 : i32, i32, i32
  }
  func.func @transform_1(%arg0: i32, %arg1: i32) -> (i32, i32) {
    %c0_i32 = arith.constant 0 : i32
    %c0_i32_0 = arith.constant 0 : i32
    return %arg0, %c0_i32 : i32, i32
  }
  func.func @transform_2(%arg0: i32, %arg1: i32) -> (i32, i32, i32) {
    %c0_i32 = arith.constant 0 : i32
    %c0_i32_0 = arith.constant 0 : i32
    return %arg1, %arg0, %c0_i32 : i32, i32, i32
  }
}

</mosaic_0001>

<llo_original>
// kernel: tpu_custom_call.1
$region0: #{tpu_custom_call.1}
  #allocation0 [shape = 'u32[]', space=smem, size = 0x4, offset = 0x4, fixed_abs, tag = 'smem constant byte address 0x4 - core index']
  #allocation1 [shape = 'u32[144,128]{1,0:T(1,128)}', space=vmem, size = 0x12000, scoped, tag = 'internal scratch']
  %s0 = inlined_call_operand.hbm [shape: f32[2,1,256], index: 0, kind: input, shape index: {}]
  %s1 = inlined_call_operand.vmem [shape: f32[1,256], index: 1, kind: input, shape index: {}]
  %s2 = inlined_call_operand.hbm [shape: f32[2,1,256], index: 2, kind: output, shape index: {}]
  %s3 = sld [smem:[#allocation0]]
  $region45: #{tpu_custom_call.1} parent=0
    _
  %s5 = ssub.s32 1, %s3
  %s6 = scalar_select 0, %s5, %s3
  $region1: #{tpu_custom_call.1} parent=0
    #allocation2 [shape = 'u8[2048]{0}', space=vmem, size = 0x800, scoped, tag = 'input window, operand 0']
    #allocation3 [shape = 's32[2]{0}', space=sflag, size = 0x8, scoped, tag = 'scoped memory for tpu_custom_call.1']
    #allocation4 [shape = 's32[2]{0}', space=sflag, size = 0x8, scoped, tag = 'scoped memory for tpu_custom_call.1']
    #allocation5 [shape = 'u8[2048]{0}', space=vmem, size = 0x800, scoped, tag = 'output window, operand 0']
    %7 = vsyncpa [#allocation3], 0
    %s8 = scalar_lea.sflag [#allocation3], 1
    %9 = vsyncpa %s8, 0
    %10 = vsyncpa [#allocation4], 0
    %s11 = scalar_lea.sflag [#allocation4], 1
    %12 = vsyncpa %s11, 0
    loop: start=0, step=1, limit=4
    $region2: #{tpu_custom_call.1} parent=1 // loop_pre_header
      _
    $region3: #{tpu_custom_call.1} parent=1 // loop_header
      %s14 = sphi 0, %s18
      %p15 = scmp.ge.s32.totalorder %s14, 4
      %s21 = sphi 0, %s33
      %s22 = sphi 0, %s29
      %s23 = sphi 0, %s21
      %s24 = sphi 0, %s22
      %s25 = sphi 0, %s23
      %s26 = sphi 0, %s24
      %s38 = sphi 0, %s40
      %s41 = sphi 0, %s38
      %s42 = sphi 0, %s41
      %s58 = sphi 0, %s42
      %s64 = sphi 0, %s66
      %s67 = sphi 0, %s64
      %s68 = sphi 0, %s67
      %s84 = sphi 0, %s68
      %s92 = sphi 0, %s94
      %s95 = sphi 0, %s92
      %s96 = sphi 0, %s95
      %s112 = sphi 0, %s96
    $region4: #{tpu_custom_call.1} parent=1 // loop_header_branch
      %17 = sbr.rel (%p15) target = $region8
    $region5: #{tpu_custom_call.1} parent=1 // loop_body
      %s19 = ssub.s32 %s14, 1
      %s20 = ssub.s32 %s14, 2
      %s27 = sadd.s32 1, %s22
      %p28 = scmp.ge.s32.totalorder %s27, 2
      %s29 = scalar_select %p28, 0, %s27
      %s30 = sadd.s32 1, %s21
      %s31 = scalar_select %p28, %s30, %s21
      %p32 = scmp.ge.s32.totalorder %s31, 1
      %s33 = scalar_select %p32, 0, %s31
      %s34 = ssub.s32 %s22, %s29
      %s35 = ssub.s32 %s21, %s33
      %s36 = sor.u32 %s34, %s35
      %p37 = scmp.eq.s32.totalorder %s36, 0
      %s39 = sadd.s32 %s38, 1
      %s40 = scalar_select %p37, %s38, %s39
      %p43 = pneg %p37
      %p44 = scmp.eq.s32.totalorder %s14, 1
      %p45 = por %p43, %p44
      %p46 = scmp.ne.s32.totalorder %s38, %s41
      %p47 = scmp.eq.s32.totalorder %s14, 0
      %p48 = por %p46, %p47
      %p49 = scmp.ne.s32.totalorder %s38, %s41
      %p50 = scmp.eq.s32.totalorder %s19, 1
      %p51 = por %p49, %p50
      %p52 = scmp.ne.s32.totalorder %s41, %s42
      %p53 = scmp.eq.s32.totalorder %s19, 0
      %p54 = por %p52, %p53
      %p55 = scmp.ne.s32.totalorder %s41, %s42
      %p56 = scmp.eq.s32.totalorder %s20, 1
      %p57 = por %p55, %p56
      %p59 = scmp.ne.s32.totalorder %s42, %s58
      %p60 = scmp.eq.s32.totalorder %s20, 0
      %p61 = por %p59, %p60
      %s62 = ssub.s32 %s21, %s33
      %p63 = scmp.eq.s32.totalorder %s62, 0
      %s65 = sadd.s32 %s64, 1
      %s66 = scalar_select %p63, %s64, %s65
      %p69 = pneg %p63
      %p70 = scmp.eq.s32.totalorder %s14, 1
      %p71 = por %p69, %p70
      %p72 = scmp.ne.s32.totalorder %s64, %s67
      %p73 = scmp.eq.s32.totalorder %s14, 0
      %p74 = por %p72, %p73
      %p75 = scmp.ne.s32.totalorder %s64, %s67
      %p76 = scmp.eq.s32.totalorder %s19, 1
      %p77 = por %p75, %p76
      %p78 = scmp.ne.s32.totalorder %s67, %s68
      %p79 = scmp.eq.s32.totalorder %s19, 0
      %p80 = por %p78, %p79
      %p81 = scmp.ne.s32.totalorder %s67, %s68
      %p82 = scmp.eq.s32.totalorder %s20, 1
      %p83 = por %p81, %p82
      %p85 = scmp.ne.s32.totalorder %s68, %s84
      %p86 = scmp.eq.s32.totalorder %s20, 0
      %p87 = por %p85, %p86
      %s88 = ssub.s32 %s22, %s29
      %s89 = ssub.s32 %s21, %s33
      %s90 = sor.u32 %s88, %s89
      %p91 = scmp.eq.s32.totalorder %s90, 0
      %s93 = sadd.s32 %s92, 1
      %s94 = scalar_select %p91, %s92, %s93
      %p97 = pneg %p91
      %p98 = scmp.eq.s32.totalorder %s14, 1
      %p99 = por %p97, %p98
      %p100 = scmp.ne.s32.totalorder %s92, %s95
      %p101 = scmp.eq.s32.totalorder %s14, 0
      %p102 = por %p100, %p101
      %p103 = scmp.ne.s32.totalorder %s92, %s95
      %p104 = scmp.eq.s32.totalorder %s19, 1
      %p105 = por %p103, %p104
      %p106 = scmp.ne.s32.totalorder %s95, %s96
      %p107 = scmp.eq.s32.totalorder %s19, 0
      %p108 = por %p106, %p107
      %p109 = scmp.ne.s32.totalorder %s95, %s96
      %p110 = scmp.eq.s32.totalorder %s20, 1
      %p111 = por %p109, %p110
      %p113 = scmp.ne.s32.totalorder %s96, %s112
      %p114 = scmp.eq.s32.totalorder %s20, 0
      %p115 = por %p113, %p114
      %p116 = scmp.le.s32.totalorder 1, %s14
      %p117 = scmp.lt.s32.totalorder %s14, 3
      %p118 = pnand %p116, %p117
      %p119 = pneg %p118
      // Predicated region
      $region9: #{tpu_custom_call.1} parent=5 // pred_check
        _
      $region10: #{tpu_custom_call.1} parent=5 // pred_check_branch
        %121 = sbr.rel (%p118) target = $region12
      $region11: #{tpu_custom_call.1} parent=5 // pred_region
        %s122 = ssub.s32 %s14, 1
        // Predicated region
        $region13: #{tpu_custom_call.1} parent=11 // pred_check
          %p123 = pneg %p80
        $region14: #{tpu_custom_call.1} parent=11 // pred_check_branch
          %125 = sbr.rel (%p123) target = $region16
        $region15: #{tpu_custom_call.1} parent=11 // pred_region
          %p126 = scmp.lt.s32.totalorder %s23, 0
          %s127 = scalar_select %p126, %s23, 0
          %s128 = smul.addr %s127, 2
          %s129 = scalar_lea.vmem %s1, %s128
        $region16: #{tpu_custom_call.1} parent=11 // pred_fallthru
          _
      $region12: #{tpu_custom_call.1} parent=5 // pred_fallthru
        _
      %p130 = scmp.lt.s32.totalorder %s14, 2
      // Predicated region
      $region17: #{tpu_custom_call.1} parent=5 // pred_check
        %p131 = pneg %p130
      $region18: #{tpu_custom_call.1} parent=5 // pred_check_branch
        %133 = sbr.rel (%p131) target = $region20
      $region19: #{tpu_custom_call.1} parent=5 // pred_region
        // Predicated region
        $region21: #{tpu_custom_call.1} parent=19 // pred_check
          %p134 = pneg %p48
        $region22: #{tpu_custom_call.1} parent=19 // pred_check_branch
          %136 = sbr.rel (%p134) target = $region24
        $region23: #{tpu_custom_call.1} parent=19 // pred_region
          %s137 = sand.u32 %s38, 1
          %s138 = scalar_lea.sflag [#allocation3], %s137
          %s139 = sand.u32 %s38, 1
          %s140 = smul.addr %s139, 2
          %s141 = scalar_lea.vmem [#allocation2], %s140
          %s143 = ssub.s32 32, 32
          %144 = vsyncadd %s138, %s143
          %s145 = smul.addr %s21, 2
          %s146 = smul.addr %s22, 2
          %s147 = sadd.s32 %s145, %s146
          %s148 = smul.addr %s147, 16
          %s149 = scalar_lea.hbm %s0, %s148
          %s151 = sshll.u32 %s141, 4
          %s152 = int_to_ptr.vmem [resolvable:$true] %s151
          %154 = dma.hbm_to_vmem [thread:$0]  %s149, 32, %s152, %s138
        $region24: #{tpu_custom_call.1} parent=19 // pred_fallthru
          _
      $region20: #{tpu_custom_call.1} parent=5 // pred_fallthru
        _
      %p155 = scmp.le.s32.totalorder 1, %s14
      %p156 = scmp.lt.s32.totalorder %s14, 3
      %p157 = pnand %p155, %p156
      %p158 = pneg %p157
      // Predicated region
      $region25: #{tpu_custom_call.1} parent=5 // pred_check
        _
      $region26: #{tpu_custom_call.1} parent=5 // pred_check_branch
        %160 = sbr.rel (%p157) target = $region28
      $region27: #{tpu_custom_call.1} parent=5 // pred_region
        %s161 = ssub.s32 %s14, 1
        %s162 = sand.u32 %s41, 1
        %s163 = scalar_lea.sflag [#allocation3], %s162
        %s164 = sand.u32 %s41, 1
        %s165 = smul.addr %s164, 2
        %s166 = scalar_lea.vmem [#allocation2], %s165
        // Predicated region
        $region29: #{tpu_custom_call.1} parent=27 // pred_check
          %p167 = pneg %p54
        $region30: #{tpu_custom_call.1} parent=27 // pred_check_branch
          %169 = sbr.rel (%p167) target = $region32
        $region31: #{tpu_custom_call.1} parent=27 // pred_region
          %170 = dma.done %s163, 32
        $region32: #{tpu_custom_call.1} parent=27 // pred_fallthru
          _
        %s171 = sand.u32 %s41, 1
        %s172 = scalar_lea.sflag [#allocation3], %s171
        %s173 = sand.u32 %s41, 1
        %s174 = smul.addr %s173, 2
        %s175 = scalar_lea.vmem [#allocation2], %s174
        %p176 = pneg %p54
        %p177 = pneg %p51
        %p178 = scmp.lt.s32.totalorder %s23, 0
        %s179 = scalar_select %p178, %s23, 0
        %s180 = smul.addr %s179, 2
        %s181 = scalar_lea.vmem %s1, %s180
        %p182 = pneg %p80
        %p183 = pneg %p77
        %p184 = pneg %p108
        %p185 = pneg %p105
        %s186 = sand.u32 %s95, 1
        %s187 = scalar_lea.sflag [#allocation4], %s186
        %s188 = sand.u32 %s95, 1
        %s189 = smul.addr %s188, 2
        %s190 = scalar_lea.vmem [#allocation5], %s189
        %p191 = scmp.lt.s32.totalorder %s23, 0
        %s192 = scalar_select %p191, %s23, 0
        %s193 = smul.addr %s192, 2
        %s194 = scalar_lea.vmem %s1, %s193
        %v195 = vld [vmem:[%s166] sm:$0x3]
        %v196 = vld [vmem:[%s194] sm:$0x3]
        %v197 = vadd.f32 %v195, %v196
        %v198 = vlaneseq
        %vm199 = vcmp.ge.s32.totalorder %v198, 0
        %vm200 = vcmp.lt.s32.totalorder %v198, 256
        %vm201 = vmand %vm199, %vm200
        %202 = vst.msk [vmem:[%s190] sm:$0x3] %vm201, %v197
        %s203 = sand.u32 %s95, 1
        %s204 = scalar_lea.sflag [#allocation4], %s203
        %s205 = sand.u32 %s95, 1
        %s206 = smul.addr %s205, 2
        %s207 = scalar_lea.vmem [#allocation5], %s206
        // Predicated region
        $region33: #{tpu_custom_call.1} parent=27 // pred_check
          %p208 = pneg %p105
        $region34: #{tpu_custom_call.1} parent=27 // pred_check_branch
          %210 = sbr.rel (%p208) target = $region36
        $region35: #{tpu_custom_call.1} parent=27 // pred_region
          %s212 = ssub.s32 32, 32
          %213 = vsyncadd %s204, %s212
          %s214 = smul.addr %s23, 2
          %s215 = smul.addr %s24, 2
          %s216 = sadd.s32 %s214, %s215
          %s217 = smul.addr %s216, 16
          %s218 = scalar_lea.hbm %s2, %s217
          %s220 = sshll.u32 %s207, 4
          %s221 = int_to_ptr.vmem [resolvable:$true] %s220
          %223 = dma.vmem_to_hbm [thread:$0]  %s221, 32, %s218, %s204
        $region36: #{tpu_custom_call.1} parent=27 // pred_fallthru
          _
      $region28: #{tpu_custom_call.1} parent=5 // pred_fallthru
        _
      %p224 = scmp.le.s32.totalorder 2, %s14
      // Predicated region
      $region37: #{tpu_custom_call.1} parent=5 // pred_check
        %p225 = pneg %p224
      $region38: #{tpu_custom_call.1} parent=5 // pred_check_branch
        %227 = sbr.rel (%p225) target = $region40
      $region39: #{tpu_custom_call.1} parent=5 // pred_region
        %s228 = ssub.s32 %s14, 2
        // Predicated region
        $region41: #{tpu_custom_call.1} parent=39 // pred_check
          %p229 = pneg %p111
        $region42: #{tpu_custom_call.1} parent=39 // pred_check_branch
          %231 = sbr.rel (%p229) target = $region44
        $region43: #{tpu_custom_call.1} parent=39 // pred_region
          %s232 = sand.u32 %s96, 1
          %s233 = scalar_lea.sflag [#allocation4], %s232
          %s234 = sand.u32 %s96, 1
          %s235 = smul.addr %s234, 2
          %s236 = scalar_lea.vmem [#allocation5], %s235
          %237 = dma.done %s233, 32
        $region44: #{tpu_custom_call.1} parent=39 // pred_fallthru
          _
      $region40: #{tpu_custom_call.1} parent=5 // pred_fallthru
        _
    $region6: #{tpu_custom_call.1} parent=1 // loop_footer
      %s18 = sadd.s32 1, %s14
    $region7: #{tpu_custom_call.1} parent=1 // loop_footer_branch
      %13 = sbr.rel target = $region3
    $region8: #{tpu_custom_call.1} parent=1 // loop_exit
      _
    %238 = vsyncpa [#allocation3], 1
    %s239 = scalar_lea.sflag [#allocation3], 1
    %240 = vsyncpa %s239, 1
    %241 = vsyncpa [#allocation4], 1
    %s242 = scalar_lea.sflag [#allocation4], 1
    %243 = vsyncpa %s242, 1

</llo_original>
